<compile_context>
chip_gen: v7x
topology: tpu7x:2x2x1
jax: 0.10.0
libtpu: 0.0.40
codegen_flags: <defaults>
</compile_context>

<pallas_src>
import functools

import jax
import jax.numpy as jnp
from jax.experimental import pallas as pl
from jax.experimental.pallas import tpu as pltpu


def _round_up(n, m):
    return ((n + m - 1) // m) * m


def som_winner_kernel(s2_ref, cb_ref, pt_ref, out_ref, *, hw_pad, som_h, som_w):
    # s2_ref : (HW_pad, 1)     f32  ||cell||^2 (padded cells = 1e30 -> never win)
    # cb_ref : (HW_pad, D_pad) cdt  codebook, pre-scaled by -2 (resident, tiny)
    # pt_ref : (D_pad, TP)     cdt  patch tile, lane-major over positions
    # out_ref: (2, TP)         f32  [winner_row/H ; winner_col/W], lane-dense
    cross = jnp.dot(cb_ref[...], pt_ref[...],
                    preferred_element_type=jnp.float32)        # (HW_pad, TP) MXU
    d2 = cross + s2_ref[...]                                   # ||s||^2 - 2 s.p

    # First-index argmin over cells: 2 sublane reductions total.
    dmin = jnp.min(d2, axis=0, keepdims=True)                  # (1, TP)
    ids = jax.lax.broadcasted_iota(jnp.int32, d2.shape, 0)     # (HW_pad, TP)
    idx = jnp.min(jnp.where(d2 <= dmin, ids, hw_pad),
                  axis=0, keepdims=True)                       # (1, TP) i32

    # Arithmetic row/col recovery on the tiny (1, TP) vector.  The +0.5 nudge
    # makes floor((idx + 0.5) / W) == idx // W robust to f32 rounding.
    idx_f = idx.astype(jnp.float32)
    r = jnp.floor((idx_f + 0.5) * (1.0 / som_w))
    c = idx_f - som_w * r
    out_ref[0:1, :] = r / som_h
    out_ref[1:2, :] = c / som_w


def som_forward(x, som, stride=1, tp=2048, compute_dtype=jnp.bfloat16,
                interpret=False):
    """Pallas implementation of SOMLayer.forward (stride=1 default).

    compute_dtype=jnp.bfloat16 streams the patch slab / codebook at half the
    HBM bytes and native MXU rate; near-tie winners can flip vs f32.  Use
    compute_dtype=jnp.float32 for exact ranking.
    """
    x = x.astype(jnp.float32)
    som = som.astype(jnp.float32)
    B, C, Hx, Wx = x.shape
    H, W, C2, KH, KW = som.shape
    assert C == C2
    D = C * KH * KW
    nJ = (Hx - KH) // stride + 1
    nK = (Wx - KW) // stride + 1
    L = nJ * nK
    HW = H * W

    cdtype = jnp.dtype(compute_dtype)
    cbytes = cdtype.itemsize
    sub = 16 if cbytes == 2 else 8

    # im2col with one fused conv.  Feature ordering is c*KH*KW + kh*KW + kw,
    # which matches som.reshape(H*W, D).  Keep the natural (B, D, L) layout —
    # the reshape is free, so no transpose pass over the big slab.
    patches = jax.lax.conv_general_dilated_patches(
        x, filter_shape=(KH, KW), window_strides=(stride, stride),
        padding='VALID', dimension_numbers=('NCHW', 'OIHW', 'NCHW'))
    patches = patches.reshape(B, D, L).astype(cdtype)

    D_pad = _round_up(D, sub)
    HW_pad = _round_up(HW, sub)

    # Position-tile size: as large as possible (amortize ~0.35 us/step), but
    # keep double-buffered tiles + (HW_pad, TP) intermediates within a budget
    # that also fits v7x's 64 MiB/core VMEM.
    TP = _round_up(min(tp, _round_up(L, 128)), 128)

    def footprint(tpv):
        return (2 * D_pad * tpv * cbytes          # patch tile, double buffered
                + 2 * HW_pad * D_pad * cbytes     # resident codebook (2 bufs)
                + 2 * HW_pad * 128 * 4            # s2, lane padded
                + 2 * 8 * tpv * 4                 # output tile, sublane padded
                + 4 * HW_pad * tpv * 4)           # d2 / iota / select temps

    vmem_budget = 48 * 1024 * 1024
    while TP > 128 and footprint(TP) > vmem_budget:
        TP -= 128
    L_pad = _round_up(L, TP)

    patches = jnp.pad(patches, ((0, 0), (0, D_pad - D), (0, L_pad - L)))

    som_c = som.reshape(HW, D).astype(cdtype)          # prototypes as used on MXU
    s2 = jnp.sum(jnp.square(som_c.astype(jnp.float32)), axis=1, keepdims=True)
    s2 = jnp.pad(s2, ((0, HW_pad - HW), (0, 0)), constant_values=1e30)
    cb = jnp.pad(-2.0 * som_c, ((0, HW_pad - HW), (0, D_pad - D)))

    kernel = functools.partial(som_winner_kernel,
                               hw_pad=HW_pad, som_h=H, som_w=W)
    out = pl.pallas_call(
        kernel,
        out_shape=jax.ShapeDtypeStruct((B, 2, L_pad), jnp.float32),
        grid=(B, L_pad // TP),
        in_specs=[
            pl.BlockSpec((HW_pad, 1), lambda b, i: (0, 0)),           # ||s||^2
            pl.BlockSpec((HW_pad, D_pad), lambda b, i: (0, 0)),       # codebook
            pl.BlockSpec((None, D_pad, TP), lambda b, i: (b, 0, i)),  # patch tile
        ],
        out_specs=pl.BlockSpec((None, 2, TP), lambda b, i: (b, 0, i)),
        compiler_params=pltpu.CompilerParams(
            dimension_semantics=("parallel", "parallel"),
            vmem_limit_bytes=int(min(56 * 2 ** 20,
                                     max(32 * 2 ** 20, 2 * footprint(TP))))),
        interpret=interpret,
    )(s2, cb, patches)

    # (B, 2, L) -> (B, 2, nJ, nK): matches torch.stack([r, c]).permute(3,0,1,2).
    return out[:, :, :L].reshape(B, 2, nJ, nK)


def som_forward_ref(x, som, stride=1):
    """Pure-JAX reference mirroring the PyTorch loops (for verification)."""
    B, C, Hx, Wx = x.shape
    H, W, _, KH, KW = som.shape
    wr, wc = [], []
    for j in range(0, Hx - KH + 1, stride):
        for k in range(0, Wx - KW + 1, stride):
            sec = x[:, :, j:j + KH, k:k + KW]                        # (B,C,KH,KW)
            diff = sec[:, None, None] - som[None]                    # (B,H,W,C,KH,KW)
            err = jnp.sqrt(jnp.mean(diff * diff, axis=(3, 4, 5)))    # (B,H,W)
            idx = jnp.argmin(err.reshape(B, H * W), axis=1)          # (B,)
            wr.append(idx // W)
            wc.append(idx % W)
    nJ = (Hx - KH) // stride + 1
    nK = (Wx - KW) // stride + 1
    wr = (jnp.stack(wr, axis=0).reshape(nJ, nK, B) / H).astype(jnp.float32)
    wc = (jnp.stack(wc, axis=0).reshape(nJ, nK, B) / W).astype(jnp.float32)
    return jnp.stack([wr, wc], axis=0).transpose(3, 0, 1, 2)


if __name__ == "__main__":
    key = jax.random.PRNGKey(0)
    kx, ks = jax.random.split(key)

    B, C, Hx, Wx = 2, 4, 16, 16
    H, W, KH, KW = 4, 4, 3, 3

    x = jax.random.uniform(kx, (B, C, Hx, Wx), dtype=jnp.float32)
    # Module __init__ uses som = 0.5 * ones(...) which makes every winner
    # trivially cell 0; use deterministic random prototypes instead so the
    # argmin path is actually exercised.
    som = jax.random.uniform(ks, (H, W, C, KH, KW), dtype=jnp.float32)

    nJ, nK = Hx - KH + 1, Wx - KW + 1
    ref = som_forward_ref(x, som, stride=1)

    # Exact-ranking f32 path; tp=128 forces a multi-tile grid (2 batches x 2
    # position tiles) and exercises padded-column discard.
    out_f32 = jax.block_until_ready(
        som_forward(x, som, stride=1, tp=128, compute_dtype=jnp.float32))
    assert out_f32.shape == (B, 2, nJ, nK), out_f32.shape
    assert bool(jnp.allclose(out_f32, ref, atol=1e-6)), "f32 mismatch vs reference"

    # Default bf16 fast path: winners may flip on near-ties, so bound the
    # disagreement rate rather than requiring bit equality.
    out_bf16 = jax.block_until_ready(som_forward(x, som, stride=1))
    assert out_bf16.shape == (B, 2, nJ, nK), out_bf16.shape
    flip_rate = float(jnp.mean((jnp.abs(out_bf16 - ref) > 1e-3).astype(jnp.float32)))
    assert flip_rate < 0.15, f"bf16 winner disagreement too high: {flip_rate}"

    # TODO(synk): SOMLayer.update()/_update_som (training-time codebook update)
    # and the matplotlib showpic/print_image visualization paths are not part
    # of forward and are not implemented.
    print("KERNEL_OK")
</pallas_src>

<mosaic_0001>
module attributes {stable_mosaic.version = 11 : i64} {
  func.func @som_winner_kernel(%arg0: i32, %arg1: i32, %arg2: memref<16x1xf32, #tpu.memory_space<vmem>>, %arg3: memref<16x40xf32, #tpu.memory_space<vmem>>, %arg4: memref<1x40x128xf32, #tpu.memory_space<vmem>>, %arg5: memref<1x2x128xf32, #tpu.memory_space<vmem>>) attributes {dimension_semantics = [#tpu.dimension_semantics<parallel>, #tpu.dimension_semantics<parallel>], iteration_bounds = array<i64: 2, 2>, scalar_prefetch = 0 : i64, scratch_operands = 0 : i64, tpu.core_type = #tpu.core_type<tc>, window_params = [{pipeline_mode = #tpu.pipeline_mode<synchronous>, transform_indices = @transform_0, window_bounds = array<i64: 16, 1>}, {pipeline_mode = #tpu.pipeline_mode<synchronous>, transform_indices = @transform_1, window_bounds = array<i64: 16, 40>}, {transform_indices = @transform_2, window_bounds = array<i64: 1, 40, 128>}, {transform_indices = @transform_3, window_bounds = array<i64: 1, 2, 128>}]} {
    %c0 = arith.constant 0 : index
    %c0_0 = arith.constant 0 : index
    %0 = vector.load %arg3[%c0, %c0_0] : memref<16x40xf32, #tpu.memory_space<vmem>>, vector<16x40xf32>
    %c0_1 = arith.constant 0 : index
    %c0_2 = arith.constant 0 : index
    %c0_3 = arith.constant 0 : index
    %1 = vector.load %arg4[%c0_1, %c0_2, %c0_3] : memref<1x40x128xf32, #tpu.memory_space<vmem>>, vector<1x40x128xf32>
    %2 = vector.shape_cast %1 : vector<1x40x128xf32> to vector<40x128xf32>
    %cst = arith.constant dense<0.000000e+00> : vector<16x128xf32>
    %3 = tpu.matmul %0, %2, %cst {dimension_numbers = #tpu.dot_dimension_numbers<[1], [0], [0], [1], [0, 0, 1, 1], [], []>} : vector<16x40xf32>, vector<40x128xf32>, vector<16x128xf32> -> vector<16x128xf32>
    %c0_4 = arith.constant 0 : index
    %c0_5 = arith.constant 0 : index
    %4 = vector.load %arg2[%c0_4, %c0_5] : memref<16x1xf32, #tpu.memory_space<vmem>>, vector<16x1xf32>
    %5 = vector.broadcast %4 : vector<16x1xf32> to vector<16x128xf32>
    %6 = arith.addf %3, %5 : vector<16x128xf32>
    %cst_6 = arith.constant dense<0x7F800000> : vector<128xf32>
    %7 = vector.multi_reduction <minimumf>, %6, %cst_6 [0] : vector<16x128xf32> to vector<128xf32>
    %8 = vector.shape_cast %7 : vector<128xf32> to vector<1x128xf32>
    %9 = tpu.iota {dimensions = array<i32: 0>} : vector<16x128xi32>
    %10 = vector.broadcast %8 : vector<1x128xf32> to vector<16x128xf32>
    %11 = arith.cmpf ole, %6, %10 : vector<16x128xf32>
    %c16_i32 = arith.constant 16 : i32
    %12 = vector.broadcast %c16_i32 : i32 to vector<16x128xi32>
    %13 = arith.select %11, %9, %12 : vector<16x128xi1>, vector<16x128xi32>
    %cst_7 = arith.constant dense<2147483647> : vector<128xi32>
    %14 = vector.multi_reduction <minsi>, %13, %cst_7 [0] : vector<16x128xi32> to vector<128xi32>
    %15 = vector.shape_cast %14 : vector<128xi32> to vector<1x128xi32>
    %16 = arith.sitofp %15 : vector<1x128xi32> to vector<1x128xf32>
    %cst_8 = arith.constant 5.000000e-01 : f32
    %17 = vector.broadcast %cst_8 : f32 to vector<1x128xf32>
    %18 = arith.addf %16, %17 : vector<1x128xf32>
    %cst_9 = arith.constant 2.500000e-01 : f32
    %19 = vector.broadcast %cst_9 : f32 to vector<1x128xf32>
    %20 = arith.mulf %18, %19 : vector<1x128xf32>
    %21 = math.floor %20 : vector<1x128xf32>
    %cst_10 = arith.constant 4.000000e+00 : f32
    %22 = vector.broadcast %cst_10 : f32 to vector<1x128xf32>
    %23 = arith.mulf %22, %21 : vector<1x128xf32>
    %24 = arith.subf %16, %23 : vector<1x128xf32>
    %cst_11 = arith.constant 4.000000e+00 : f32
    %25 = vector.broadcast %cst_11 : f32 to vector<1x128xf32>
    %26 = arith.divf %21, %25 : vector<1x128xf32>
    %c0_12 = arith.constant 0 : index
    %c0_13 = arith.constant 0 : index
    %c0_14 = arith.constant 0 : index
    %27 = vector.load %arg5[%c0_12, %c0_13, %c0_14] : memref<1x2x128xf32, #tpu.memory_space<vmem>>, vector<1x1x128xf32>
    %28 = vector.shape_cast %27 : vector<1x1x128xf32> to vector<1x128xf32>
    %29 = vector.shape_cast %26 : vector<1x128xf32> to vector<1x1x128xf32>
    tpu.vector_store %arg5[%c0_12, %c0_13, %c0_14], %29 {strides = array<i32>} : memref<1x2x128xf32, #tpu.memory_space<vmem>>, vector<1x1x128xf32>,
    %cst_15 = arith.constant 4.000000e+00 : f32
    %30 = vector.broadcast %cst_15 : f32 to vector<1x128xf32>
    %31 = arith.divf %24, %30 : vector<1x128xf32>
    %c0_16 = arith.constant 0 : index
    %c1 = arith.constant 1 : index
    %c0_17 = arith.constant 0 : index
    %32 = vector.load %arg5[%c0_16, %c1, %c0_17] : memref<1x2x128xf32, #tpu.memory_space<vmem>>, vector<1x1x128xf32>
    %33 = vector.shape_cast %32 : vector<1x1x128xf32> to vector<1x128xf32>
    %34 = vector.shape_cast %31 : vector<1x128xf32> to vector<1x1x128xf32>
    tpu.vector_store %arg5[%c0_16, %c1, %c0_17], %34 {strides = array<i32>} : memref<1x2x128xf32, #tpu.memory_space<vmem>>, vector<1x1x128xf32>,
    return
  }
  func.func @transform_0(%arg0: i32, %arg1: i32) -> (i32, i32) {
    %c0_i32 = arith.constant 0 : i32
    %c0_i32_0 = arith.constant 0 : i32
    %c0_i32_1 = arith.constant 0 : i32
    return %c0_i32, %c0_i32_0 : i32, i32
  }
  func.func @transform_1(%arg0: i32, %arg1: i32) -> (i32, i32) {
    %c0_i32 = arith.constant 0 : i32
    %c0_i32_0 = arith.constant 0 : i32
    %c0_i32_1 = arith.constant 0 : i32
    return %c0_i32, %c0_i32_0 : i32, i32
  }
  func.func @transform_2(%arg0: i32, %arg1: i32) -> (i32, i32, i32) {
    %c0_i32 = arith.constant 0 : i32
    %c0_i32_0 = arith.constant 0 : i32
    return %arg0, %c0_i32, %arg1 : i32, i32, i32
  }
  func.func @transform_3(%arg0: i32, %arg1: i32) -> (i32, i32, i32) {
    %c0_i32 = arith.constant 0 : i32
    %c0_i32_0 = arith.constant 0 : i32
    return %arg0, %c0_i32, %arg1 : i32, i32, i32
  }
}

</mosaic_0001>

<llo_original>
// kernel: tpu_custom_call.1
$region0: #{tpu_custom_call.1}
  #allocation0 [shape = 'u32[]', space=smem, size = 0x4, offset = 0x4, fixed_abs, tag = 'smem constant byte address 0x4 - core index']
  #allocation1 [shape = 'u32[144,128]{1,0:T(1,128)}', space=vmem, size = 0x12000, scoped, tag = 'internal scratch']
  %s0 = inlined_call_operand.vmem [shape: f32[16,1], index: 0, kind: input, shape index: {}]
  %s1 = inlined_call_operand.vmem [shape: f32[16,40], index: 1, kind: input, shape index: {}]
  %s2 = inlined_call_operand.hbm [shape: f32[2,40,256], index: 2, kind: input, shape index: {}]
  %s3 = inlined_call_operand.hbm [shape: f32[2,2,256], index: 3, kind: output, shape index: {}]
  %s4 = sld [smem:[#allocation0]]
  $region49: #{tpu_custom_call.1} parent=0
    _
  %s6 = ssub.s32 1, %s4
  %s7 = scalar_select 0, %s6, %s4
  $region1: #{tpu_custom_call.1} parent=0
    #allocation2 [shape = 'u8[40960]{0}', space=vmem, size = 0xa000, scoped, tag = 'input window, operand 2']
    #allocation3 [shape = 's32[2]{0}', space=sflag, size = 0x8, scoped, tag = 'scoped memory for tpu_custom_call.1']
    #allocation4 [shape = 's32[2]{0}', space=sflag, size = 0x8, scoped, tag = 'scoped memory for tpu_custom_call.1']
    #allocation5 [shape = 'u8[2048]{0}', space=vmem, size = 0x800, scoped, tag = 'output window, operand 0']
    %8 = vsyncpa [#allocation3], 0
    %s9 = scalar_lea.sflag [#allocation3], 1
    %10 = vsyncpa %s9, 0
    %11 = vsyncpa [#allocation4], 0
    %s12 = scalar_lea.sflag [#allocation4], 1
    %13 = vsyncpa %s12, 0
    loop: start=0, step=1, limit=6
    $region2: #{tpu_custom_call.1} parent=1 // loop_pre_header
      _
    $region3: #{tpu_custom_call.1} parent=1 // loop_header
      %s15 = sphi 0, %s19
      %p16 = scmp.ge.s32.totalorder %s15, 6
      %s22 = sphi 0, %s34
      %s23 = sphi 0, %s30
      %s24 = sphi 0, %s22
      %s25 = sphi 0, %s23
      %s26 = sphi 0, %s24
      %s27 = sphi 0, %s25
      %s35 = sphi 0, %s35
      %s37 = sphi 0, %s35
      %s38 = sphi 0, %s37
      %s52 = sphi 0, %s38
      %s56 = sphi 0, %s56
      %s58 = sphi 0, %s56
      %s59 = sphi 0, %s58
      %s73 = sphi 0, %s59
      %s81 = sphi 0, %s83
      %s84 = sphi 0, %s81
      %s85 = sphi 0, %s84
      %s101 = sphi 0, %s85
      %s109 = sphi 0, %s111
      %s112 = sphi 0, %s109
      %s113 = sphi 0, %s112
      %s129 = sphi 0, %s113
    $region4: #{tpu_custom_call.1} parent=1 // loop_header_branch
      %18 = sbr.rel (%p16) target = $region8
    $region5: #{tpu_custom_call.1} parent=1 // loop_body
      %s20 = ssub.s32 %s15, 1
      %s21 = ssub.s32 %s15, 2
      %s28 = sadd.s32 1, %s23
      %p29 = scmp.ge.s32.totalorder %s28, 2
      %s30 = scalar_select %p29, 0, %s28
      %s31 = sadd.s32 1, %s22
      %s32 = scalar_select %p29, %s31, %s22
      %p33 = scmp.ge.s32.totalorder %s32, 2
      %s34 = scalar_select %p33, 0, %s32
      %s36 = sadd.s32 %s35, 1
      %p39 = scmp.eq.s32.totalorder %s15, 3
      %p40 = scmp.ne.s32.totalorder %s35, %s37
      %p41 = scmp.eq.s32.totalorder %s15, 0
      %p42 = por %p40, %p41
      %p43 = scmp.ne.s32.totalorder %s35, %s37
      %p44 = scmp.eq.s32.totalorder %s20, 3
      %p45 = por %p43, %p44
      %p46 = scmp.ne.s32.totalorder %s37, %s38
      %p47 = scmp.eq.s32.totalorder %s20, 0
      %p48 = por %p46, %p47
      %p49 = scmp.ne.s32.totalorder %s37, %s38
      %p50 = scmp.eq.s32.totalorder %s21, 3
      %p51 = por %p49, %p50
      %p53 = scmp.ne.s32.totalorder %s38, %s52
      %p54 = scmp.eq.s32.totalorder %s21, 0
      %p55 = por %p53, %p54
      %s57 = sadd.s32 %s56, 1
      %p60 = scmp.eq.s32.totalorder %s15, 3
      %p61 = scmp.ne.s32.totalorder %s56, %s58
      %p62 = scmp.eq.s32.totalorder %s15, 0
      %p63 = por %p61, %p62
      %p64 = scmp.ne.s32.totalorder %s56, %s58
      %p65 = scmp.eq.s32.totalorder %s20, 3
      %p66 = por %p64, %p65
      %p67 = scmp.ne.s32.totalorder %s58, %s59
      %p68 = scmp.eq.s32.totalorder %s20, 0
      %p69 = por %p67, %p68
      %p70 = scmp.ne.s32.totalorder %s58, %s59
      %p71 = scmp.eq.s32.totalorder %s21, 3
      %p72 = por %p70, %p71
      %p74 = scmp.ne.s32.totalorder %s59, %s73
      %p75 = scmp.eq.s32.totalorder %s21, 0
      %p76 = por %p74, %p75
      %s77 = ssub.s32 %s22, %s34
      %s78 = ssub.s32 %s23, %s30
      %s79 = sor.u32 %s77, %s78
      %p80 = scmp.eq.s32.totalorder %s79, 0
      %s82 = sadd.s32 %s81, 1
      %s83 = scalar_select %p80, %s81, %s82
      %p86 = pneg %p80
      %p87 = scmp.eq.s32.totalorder %s15, 3
      %p88 = por %p86, %p87
      %p89 = scmp.ne.s32.totalorder %s81, %s84
      %p90 = scmp.eq.s32.totalorder %s15, 0
      %p91 = por %p89, %p90
      %p92 = scmp.ne.s32.totalorder %s81, %s84
      %p93 = scmp.eq.s32.totalorder %s20, 3
      %p94 = por %p92, %p93
      %p95 = scmp.ne.s32.totalorder %s84, %s85
      %p96 = scmp.eq.s32.totalorder %s20, 0
      %p97 = por %p95, %p96
      %p98 = scmp.ne.s32.totalorder %s84, %s85
      %p99 = scmp.eq.s32.totalorder %s21, 3
      %p100 = por %p98, %p99
      %p102 = scmp.ne.s32.totalorder %s85, %s101
      %p103 = scmp.eq.s32.totalorder %s21, 0
      %p104 = por %p102, %p103
      %s105 = ssub.s32 %s22, %s34
      %s106 = ssub.s32 %s23, %s30
      %s107 = sor.u32 %s105, %s106
      %p108 = scmp.eq.s32.totalorder %s107, 0
      %s110 = sadd.s32 %s109, 1
      %s111 = scalar_select %p108, %s109, %s110
      %p114 = pneg %p108
      %p115 = scmp.eq.s32.totalorder %s15, 3
      %p116 = por %p114, %p115
      %p117 = scmp.ne.s32.totalorder %s109, %s112
      %p118 = scmp.eq.s32.totalorder %s15, 0
      %p119 = por %p117, %p118
      %p120 = scmp.ne.s32.totalorder %s109, %s112
      %p121 = scmp.eq.s32.totalorder %s20, 3
      %p122 = por %p120, %p121
      %p123 = scmp.ne.s32.totalorder %s112, %s113
      %p124 = scmp.eq.s32.totalorder %s20, 0
      %p125 = por %p123, %p124
      %p126 = scmp.ne.s32.totalorder %s112, %s113
      %p127 = scmp.eq.s32.totalorder %s21, 3
      %p128 = por %p126, %p127
      %p130 = scmp.ne.s32.totalorder %s113, %s129
      %p131 = scmp.eq.s32.totalorder %s21, 0
      %p132 = por %p130, %p131
      %p133 = scmp.le.s32.totalorder 1, %s15
      %p134 = scmp.lt.s32.totalorder %s15, 5
      %p135 = pnand %p133, %p134
      %p136 = pneg %p135
      // Predicated region
      $region9: #{tpu_custom_call.1} parent=5 // pred_check
        _
      $region10: #{tpu_custom_call.1} parent=5 // pred_check_branch
        %138 = sbr.rel (%p135) target = $region12
      $region11: #{tpu_custom_call.1} parent=5 // pred_region
        %s139 = ssub.s32 %s15, 1
        // Predicated region
        $region13: #{tpu_custom_call.1} parent=11 // pred_check
          %p140 = pneg %p48
        $region14: #{tpu_custom_call.1} parent=11 // pred_check_branch
          %142 = sbr.rel (%p140) target = $region16
        $region15: #{tpu_custom_call.1} parent=11 // pred_region
          _
        $region16: #{tpu_custom_call.1} parent=11 // pred_fallthru
          _
        // Predicated region
        $region17: #{tpu_custom_call.1} parent=11 // pred_check
          %p143 = pneg %p69
        $region18: #{tpu_custom_call.1} parent=11 // pred_check_branch
          %145 = sbr.rel (%p143) target = $region20
        $region19: #{tpu_custom_call.1} parent=11 // pred_region
          _
        $region20: #{tpu_custom_call.1} parent=11 // pred_fallthru
          _
      $region12: #{tpu_custom_call.1} parent=5 // pred_fallthru
        _
      %p146 = scmp.lt.s32.totalorder %s15, 4
      // Predicated region
      $region21: #{tpu_custom_call.1} parent=5 // pred_check
        %p147 = pneg %p146
      $region22: #{tpu_custom_call.1} parent=5 // pred_check_branch
        %149 = sbr.rel (%p147) target = $region24
      $region23: #{tpu_custom_call.1} parent=5 // pred_region
        // Predicated region
        $region25: #{tpu_custom_call.1} parent=23 // pred_check
          %p150 = pneg %p91
        $region26: #{tpu_custom_call.1} parent=23 // pred_check_branch
          %152 = sbr.rel (%p150) target = $region28
        $region27: #{tpu_custom_call.1} parent=23 // pred_region
          %s153 = sand.u32 %s81, 1
          %s154 = scalar_lea.sflag [#allocation3], %s153
          %s155 = sand.u32 %s81, 1
          %s156 = smul.addr %s155, 40
          %s157 = scalar_lea.vmem [#allocation2], %s156
          %s159 = ssub.s32 640, 640
          %160 = vsyncadd %s154, %s159
          %s161 = smul.addr %s22, 10
          %s162 = sadd.s32 %s23, %s161
          %s163 = smul.addr %s162, 128
          %s164 = scalar_lea.hbm %s2, %s163
          %s165 = sshll.u32 %s157, 4
          %s166 = int_to_ptr.vmem [resolvable:$true] %s165
          %171 = dma.hbm_to_vmem [thread:$0]  %s164, 640, %s166, %s154, 256, 128, 8
        $region28: #{tpu_custom_call.1} parent=23 // pred_fallthru
          _
      $region24: #{tpu_custom_call.1} parent=5 // pred_fallthru
        _
      %p172 = scmp.le.s32.totalorder 1, %s15
      %p173 = scmp.lt.s32.totalorder %s15, 5
      %p174 = pnand %p172, %p173
      %p175 = pneg %p174
      // Predicated region
      $region29: #{tpu_custom_call.1} parent=5 // pred_check
        _
      $region30: #{tpu_custom_call.1} parent=5 // pred_check_branch
        %177 = sbr.rel (%p174) target = $region32
      $region31: #{tpu_custom_call.1} parent=5 // pred_region
        %s178 = ssub.s32 %s15, 1
        %s179 = sand.u32 %s84, 1
        %s180 = scalar_lea.sflag [#allocation3], %s179
        %s181 = sand.u32 %s84, 1
        %s182 = smul.addr %s181, 40
        %s183 = scalar_lea.vmem [#allocation2], %s182
        // Predicated region
        $region33: #{tpu_custom_call.1} parent=31 // pred_check
          %p184 = pneg %p97
        $region34: #{tpu_custom_call.1} parent=31 // pred_check_branch
          %186 = sbr.rel (%p184) target = $region36
        $region35: #{tpu_custom_call.1} parent=31 // pred_region
          %187 = dma.done %s180, 640
        $region36: #{tpu_custom_call.1} parent=31 // pred_fallthru
          _
        %p188 = pneg %p48
        %p189 = pneg %p45
        %p190 = pneg %p69
        %p191 = pneg %p66
        %s192 = sand.u32 %s84, 1
        %s193 = scalar_lea.sflag [#allocation3], %s192
        %s194 = sand.u32 %s84, 1
        %s195 = smul.addr %s194, 40
        %s196 = scalar_lea.vmem [#allocation2], %s195
        %p197 = pneg %p97
        %p198 = pneg %p94
        %p199 = pneg %p125
        %p200 = pneg %p122
        %s201 = sand.u32 %s112, 1
        %s202 = scalar_lea.sflag [#allocation4], %s201
        %s203 = sand.u32 %s112, 1
        %s204 = smul.addr %s203, 2
        %s205 = scalar_lea.vmem [#allocation5], %s204
        %v206 = vld [vmem:[%s1] sm:$0xff]
        %v207 = vld [vmem:[%s1 + $0x8] sm:$0xff]
        %v208 = vld [vmem:[%s183] sm:$0xff]
        %v209 = vld [vmem:[%s183 + $0x8] sm:$0xff]
        %v210 = vld [vmem:[%s183 + $0x10] sm:$0xff]
        %v211 = vld [vmem:[%s183 + $0x18] sm:$0xff]
        %v212 = vld [vmem:[%s183 + $0x20] sm:$0xff]
        %v213 = vld [vmem:[%s0] sm:$0xff]
        %v214 = vld [vmem:[%s0 + $0x8] sm:$0xff]
        %216 = vset.pattern.permute.xlu0 0
        %217 = vperm.xlu0 %216, %v213
        %v218 = vpop.permute.xlu0 %217
        %221 = vset.pattern.permute.xlu0 0
        %222 = vperm.xlu0 %221, %v214
        %v223 = vpop.permute.xlu0 %222
        %vm225 = vcmask 326656
        %v227 = vsel %vm225, %v206, 0
        %v230 = vsel %vm225, %v207, 0
        %232 = vmatprep.subr.mxu0 0.0
        %233 = vmatpush1.msra.mxu0 %v208
        %234 = vmatprep.subr.mxu0 0.0
        %235 = vmatpush1.msra.mxu0 %v209
        %236 = vmatprep.subr.mxu0 0.0
        %237 = vmatpush1.msra.mxu0 %v210
        %238 = vmatprep.subr.mxu0 0.0
        %239 = vmatpush1.msra.mxu0 %v211
        %240 = vmatprep.subr.mxu0 0.0
        %241 = vmatpush1.msra.mxu0 %v212
        %242 = vmatprep.subr.mxu0 0.0
        %243 = vmatpush1.msra.mxu0 0.0
        %244 = vmatprep.subr.mxu0 0.0
        %245 = vmatpush1.msra.mxu0 0.0
        %246 = vmatprep.subr.mxu0 0.0
        %247 = vmatpush1.msra.mxu0 0.0
        %248 = vmatprep.subr.mxu0 0.0
        %249 = vmatpush1.msra.mxu0 0.0
        %250 = vmatprep.subr.mxu0 0.0
        %251 = vmatpush1.msra.mxu0 0.0
        %252 = vmatprep.subr.mxu0 0.0
        %253 = vmatpush1.msra.mxu0 0.0
        %254 = vmatprep.subr.mxu0 0.0
        %255 = vmatpush1.msra.mxu0 0.0
        %256 = vmatprep.subr.mxu0 0.0
        %257 = vmatpush1.msra.mxu0 0.0
        %258 = vmatprep.subr.mxu0 0.0
        %259 = vmatpush1.msra.mxu0 0.0
        %260 = vmatprep.subr.mxu0 0.0
        %261 = vmatpush1.msra.mxu0 0.0
        %262 = vmatprep.subr.mxu0 0.0
        %263 = vmatpush1.msra.mxu0 0.0
        %264 = vmatprep.subr.mxu0 0.0
        %265 = vmatpush1.msra.mxu0 0.0
        %266 = vmatprep.subr.mxu0 0.0
        %267 = vmatpush1.msra.mxu0 0.0
        %268 = vmatprep.subr.mxu0 0.0
        %269 = vmatpush1.msra.mxu0 0.0
        %270 = vmatprep.subr.mxu0 0.0
        %271 = vmatpush1.msra.mxu0 0.0
        %272 = vmatprep.subr.mxu0 0.0
        %273 = vmatpush1.msra.mxu0 0.0
        %274 = vmatprep.subr.mxu0 0.0
        %275 = vmatpush1.msra.mxu0 0.0
        %276 = vmatprep.subr.mxu0 0.0
        %277 = vmatpush1.msra.mxu0 0.0
        %278 = vmatprep.subr.mxu0 0.0
        %279 = vmatpush1.msra.mxu0 0.0
        %280 = vmatprep.subr.mxu0 0.0
        %281 = vmatpush1.msra.mxu0 0.0
        %282 = vmatprep.subr.mxu0 0.0
        %283 = vmatpush1.msra.mxu0 0.0
        %284 = vmatprep.subr.mxu0 0.0
        %285 = vmatpush1.msra.mxu0 0.0
        %286 = vmatprep.subr.mxu0 0.0
        %287 = vmatpush1.msra.mxu0 0.0
        %288 = vmatprep.subr.mxu0 0.0
        %289 = vmatpush1.msra.mxu0 0.0
        %290 = vmatprep.subr.mxu0 0.0
        %291 = vmatpush1.msra.mxu0 0.0
        %292 = vmatprep.subr.mxu0 0.0
        %293 = vmatpush1.msra.mxu0 0.0
        %294 = vmatprep.subr.mxu0 0.0
        %295 = vmatpush1.msra.mxu0 0.0
        %296 = vmatprep.mubr.f32.mxu0 0.0
        %297 = vmatmul.mubr.f32.gmra.mrb[0].mxu0 %v227
        %v298 = vpop.f32.mrb[0].mxu0
        %v299 = vadd.f32 %v218, %v298
        %v300 = vpop.f32.mrb[0].mxu0
        %301 = vmatprep.mubr.f32.mxu0 0.0
        %302 = vmatmul.mubr.f32.gmra.mrb[0].mxu0 %v230
        %v303 = vpop.f32.mrb[0].mxu0
        %v304 = vadd.f32 %v223, %v303
        %v305 = vpop.f32.mrb[0].mxu0
        %306 = vdwg.mxu0
        %v307 = vmin.f32 %v299, %v304
        %v308 = vrot.slane %v307, 4
        %v309 = vmin.f32 %v307, %v308
        %v310 = vrot.slane %v309, 2
        %v311 = vmin.f32 %v309, %v310
        %v312 = vrot.slane %v311, 1
        %v313 = vmin.f32 %v311, %v312
        %v314 = vlaneseq
        %v315 = vshrl.u32 %v314, 7
        %v316 = vadd.s32 %v315, 8
        %vm317 = vcmp.le.f32.partialorder %v299, %v313
        %vm318 = vcmp.le.f32.partialorder %v304, %v313
        %v319 = vsel %vm317, %v315, 16
        %v320 = vsel %vm318, %v316, 16
        %vm321 = vcmp.lt.s32.totalorder %v319, %v320
        %v322 = vsel %vm321, %v319, %v320
        %v323 = vrot.slane %v322, 4
        %vm324 = vcmp.lt.s32.totalorder %v322, %v323
        %v325 = vsel %vm324, %v322, %v323
        %v326 = vrot.slane %v325, 2
        %vm327 = vcmp.lt.s32.totalorder %v325, %v326
        %v328 = vsel %vm327, %v325, %v326
        %v329 = vrot.slane %v328, 1
        %vm330 = vcmp.lt.s32.totalorder %v328, %v329
        %v331 = vsel %vm330, %v328, %v329
        %v332 = vcvt.s32.f32 %v331
        %v333 = vadd.f32 %v332, 0.5
        %v334 = vmul.f32 %v333, 0.25
        %v335 = vfloor.f32 %v334
        %v336 = vmul.f32 %v335, 4.0
        %v337 = vsub.f32 %v332, %v336
        %v338 = vrcp.pop 4.0
        %v339 = vmul.f32 %v335, %v338
        %340 = vst [vmem:[%s205] sm:$0x1] %v339
        %v341 = vmul.f32 %v337, %v338
        %342 = vst [vmem:[%s205 + $0x1] sm:$0x1] %v341
        %s343 = sand.u32 %s112, 1
        %s344 = scalar_lea.sflag [#allocation4], %s343
        %s345 = sand.u32 %s112, 1
        %s346 = smul.addr %s345, 2
        %s347 = scalar_lea.vmem [#allocation5], %s346
        // Predicated region
        $region37: #{tpu_custom_call.1} parent=31 // pred_check
          %p348 = pneg %p122
        $region38: #{tpu_custom_call.1} parent=31 // pred_check_branch
          %350 = sbr.rel (%p348) target = $region40
        $region39: #{tpu_custom_call.1} parent=31 // pred_region
          %s352 = ssub.s32 32, 32
          %353 = vsyncadd %s344, %s352
          %s354 = smul.addr %s24, 2
          %s355 = sadd.s32 %s25, %s354
          %s356 = smul.addr %s355, 32
          %s357 = scalar_lea.hbm %s3, %s356
          %s359 = sshll.u32 %s347, 4
          %s360 = int_to_ptr.vmem [resolvable:$true] %s359
          %362 = dma.vmem_to_hbm [thread:$0]  %s360, 32, %s357, %s344
        $region40: #{tpu_custom_call.1} parent=31 // pred_fallthru
          _
      $region32: #{tpu_custom_call.1} parent=5 // pred_fallthru
        _
      %p363 = scmp.le.s32.totalorder 2, %s15
      // Predicated region
      $region41: #{tpu_custom_call.1} parent=5 // pred_check
        %p364 = pneg %p363
      $region42: #{tpu_custom_call.1} parent=5 // pred_check_branch
        %366 = sbr.rel (%p364) target = $region44
      $region43: #{tpu_custom_call.1} parent=5 // pred_region
        %s367 = ssub.s32 %s15, 2
        // Predicated region
        $region45: #{tpu_custom_call.1} parent=43 // pred_check
          %p368 = pneg %p128
        $region46: #{tpu_custom_call.1} parent=43 // pred_check_branch
          %370 = sbr.rel (%p368) target = $region48
        $region47: #{tpu_custom_call.1} parent=43 // pred_region
          %s371 = sand.u32 %s113, 1
          %s372 = scalar_lea.sflag [#allocation4], %s371
          %s373 = sand.u32 %s113, 1
          %s374 = smul.addr %s373, 2
          %s375 = scalar_lea.vmem [#allocation5], %s374
          %376 = dma.done %s372, 32
        $region48: #{tpu_custom_call.1} parent=43 // pred_fallthru
          _
      $region44: #{tpu_custom_call.1} parent=5 // pred_fallthru
        _
    $region6: #{tpu_custom_call.1} parent=1 // loop_footer
      %s19 = sadd.s32 1, %s15
    $region7: #{tpu_custom_call.1} parent=1 // loop_footer_branch
      %14 = sbr.rel target = $region3
    $region8: #{tpu_custom_call.1} parent=1 // loop_exit
      _
    %377 = vsyncpa [#allocation3], 1
    %s378 = scalar_lea.sflag [#allocation3], 1
    %379 = vsyncpa %s378, 1
    %380 = vsyncpa [#allocation4], 1
    %s381 = scalar_lea.sflag [#allocation4], 1
    %382 = vsyncpa %s381, 1

</llo_original>
